<compile_context>
chip_gen: v5e
topology: v5e:2x2
jax: 0.10.0
libtpu: 0.0.40
codegen_flags: <defaults>
</compile_context>

<pallas_src>
import functools
import math

import numpy as np

import jax
import jax.numpy as jnp
from jax.experimental import pallas as pl
from jax.experimental.pallas import tpu as pltpu


_SUBLANE = 8
_MIB = 1024 * 1024


def _round_up(v, mult):
    return -(-v // mult) * mult


@functools.lru_cache(maxsize=None)
def _vmem_capacity_bytes():
    """Physical VMEM per TensorCore (128 MiB on v5e/v6e, 64 MiB on v7x)."""
    try:
        cap = int(getattr(pltpu.get_tpu_info(), "vmem_capacity_bytes", 0))
        if cap > 0:
            return cap
    except Exception:
        pass
    return 64 * _MIB  # conservative fallback (v7x-sized)


def _ffn_kernel(x_ref, w1_ref, b1_ref, w2_ref, b2_ref, o_ref):
    # x_ref:  (TM, dim)       token tile in the caller's dtype
    # w1_ref: (dim, hidden)   first linear weight, pre-transposed, resident
    # b1_ref: (1, hidden)     f32 bias
    # w2_ref: (hidden, dim)   second linear weight, pre-transposed, resident
    # b2_ref: (1, dim)        f32 bias
    cdt = w1_ref.dtype
    x = x_ref[...].astype(cdt)          # in-kernel cast: no wrapper HBM round-trip

    # ---- Linear 1 (MXU, f32 accumulation) + bias ----
    h = jnp.dot(x, w1_ref[...], preferred_element_type=jnp.float32)
    h = h + b1_ref[...]

    # ---- SiLU on the f32 accumulator (v5e has no bf16 VPU/EUP, so keep f32) ----
    h = h * jax.nn.sigmoid(h)

    # ---- Linear 2 (MXU, f32 accumulation) + bias ----
    o = jnp.dot(h.astype(cdt), w2_ref[...], preferred_element_type=jnp.float32)
    o = o + b2_ref[...]

    o_ref[...] = o.astype(o_ref.dtype)


def prepare_ffn_params(w1, b1, w2, b2, compute_dtype="auto"):
    """One-time (model-init) weight prep: transpose to (in, out) layout and cast.

    PyTorch nn.Linear layout: w1 (hidden, dim), b1 (hidden,), w2 (dim, hidden), b2 (dim,).
    compute_dtype "auto"/None -> bf16 matmul operands (f32 accumulation); or an explicit dtype.
    """
    if compute_dtype is None or (isinstance(compute_dtype, str) and compute_dtype == "auto"):
        cdt = jnp.bfloat16
    else:
        cdt = compute_dtype
    w1t = jnp.asarray(w1).T.astype(cdt)                        # (dim, hidden)
    w2t = jnp.asarray(w2).T.astype(cdt)                        # (hidden, dim)
    b1r = jnp.asarray(b1).reshape(1, -1).astype(jnp.float32)   # (1, hidden)
    b2r = jnp.asarray(b2).reshape(1, -1).astype(jnp.float32)   # (1, dim)
    return w1t, b1r, w2t, b2r


def _select_tile_m(m, dim, hidden, io_bytes, comp_bytes, block_m, budget):
    """Largest sublane-aligned M tile fitting `budget`, capped so the grid has ~>=4 steps."""
    weight_bytes = 2 * dim * hidden * comp_bytes + (dim + hidden) * 4   # single-buffered

    def est(t):
        io = 4 * t * dim * io_bytes                                     # x & out, double-buffered
        inter = t * dim * (4 + comp_bytes) + t * hidden * (8 + comp_bytes)  # f32 temps + casts
        return io + inter + weight_bytes

    if m <= _SUBLANE:
        return m, est(m)

    tm_cap = max(_SUBLANE, _round_up(pl.cdiv(m, 4), _SUBLANE))          # >=2 steps per v7x TC
    tm = min(_round_up(max(block_m, _SUBLANE), _SUBLANE), tm_cap)
    while tm > _SUBLANE and est(tm) > budget:
        tm = max(_SUBLANE, _round_up(tm // 2, _SUBLANE))
    return tm, est(tm)


@functools.partial(jax.jit, static_argnames=("block_m", "single_buffer_weights"))
def feed_forward_prepared(x, w1t, b1, w2t, b2, *, block_m=8192, single_buffer_weights=True):
    """FFN on pre-transposed / pre-cast params (see prepare_ffn_params)."""
    dim = x.shape[-1]
    hidden = w1t.shape[1]
    lead = x.shape[:-1]
    m = math.prod(lead) if lead else 1

    out_dtype = x.dtype
    io_bytes = np.dtype(out_dtype).itemsize
    comp_bytes = np.dtype(w1t.dtype).itemsize

    cap = _vmem_capacity_bytes()
    limit_ceiling = max(32 * _MIB, cap - 16 * _MIB)   # ~48 MiB on v7x, ~112 MiB on v5e/v6e
    budget = (limit_ceiling * 7) // 8

    tm, est_bytes = _select_tile_m(m, dim, hidden, io_bytes, comp_bytes, block_m, budget)
    # TODO(synk): if the single-buffered weights alone exceed `limit_ceiling` (very wide
    # FFNs), the hidden/dim axes would need tiling too; not required for MobileViT sizes.
    vmem_limit = int(min(limit_ceiling, max(32 * _MIB, est_bytes + 16 * _MIB)))

    x2d = x.reshape(m, dim)            # collapsing leading dims: layout no-op
    grid = (pl.cdiv(m, tm),)

    def resident(shape):
        ndim = len(shape)
        imap = lambda i: (0,) * ndim
        if single_buffer_weights:
            # Constant index_map => DMA'd once; Buffered(1) also drops the 2x allocation.
            return pl.BlockSpec(shape, imap, pipeline_mode=pl.Buffered(1))
        return pl.BlockSpec(shape, imap)

    cost = pl.CostEstimate(
        flops=4 * m * dim * hidden,                   # two matmuls
        transcendentals=m * hidden,                   # sigmoid
        bytes_accessed=(2 * m * dim * io_bytes        # read x, write out
                        + 2 * dim * hidden * comp_bytes
                        + (dim + hidden) * 4),
    )

    out2d = pl.pallas_call(
        _ffn_kernel,
        out_shape=jax.ShapeDtypeStruct((m, dim), out_dtype),
        grid_spec=pltpu.PrefetchScalarGridSpec(
            num_scalar_prefetch=0,
            grid=grid,
            in_specs=[
                pl.BlockSpec((tm, dim), lambda i: (i, 0)),   # x tile (pipelined)
                resident((dim, hidden)),                     # W1^T (resident)
                resident((1, hidden)),                       # b1
                resident((hidden, dim)),                     # W2^T (resident)
                resident((1, dim)),                          # b2
            ],
            out_specs=pl.BlockSpec((tm, dim), lambda i: (i, 0)),  # unpadded, direct write
        ),
        compiler_params=pltpu.CompilerParams(
            dimension_semantics=("parallel",),   # shard the M grid across v7x's two TCs
            vmem_limit_bytes=vmem_limit,
        ),
        cost_estimate=cost,
    )(x2d, w1t, b1, w2t, b2)

    return out2d.reshape(*lead, dim)


def feed_forward(x, w1, b1, w2, b2, *, block_m=8192, compute_dtype="auto"):
    """FeedForward matching the PyTorch module (nn.Linear weight layout (out, in)).

    compute_dtype="auto" (default) uses bf16 matmul operands with f32 accumulation
    (native MXU dtype on v5e/v6e/v7x); pass jnp.float32 for an exact-f32 path.
    """
    params = prepare_ffn_params(w1, b1, w2, b2, compute_dtype)
    try:
        return feed_forward_prepared(x, *params, block_m=block_m)
    except Exception:
        # Fallback for toolchains where pipeline_mode=pl.Buffered(1) is not supported
        # on the top-level pallas_call pipeline: use default double-buffered residents.
        return feed_forward_prepared(x, *params, block_m=block_m,
                                     single_buffer_weights=False)


if __name__ == "__main__":
    # Small shapes consistent with MobileViT's transformer FFN: tokens of size `dim`.
    B, S, DIM, HIDDEN = 2, 8, 32, 64

    key = jax.random.PRNGKey(0)
    kx, kw1, kb1, kw2, kb2 = jax.random.split(key, 5)

    x = jax.random.normal(kx, (B, S, DIM), dtype=jnp.float32)
    # Deterministic parameter init (PyTorch-like scale, synthetic).
    w1 = jax.random.normal(kw1, (HIDDEN, DIM), dtype=jnp.float32) * (1.0 / DIM ** 0.5)
    b1 = jax.random.normal(kb1, (HIDDEN,), dtype=jnp.float32) * 0.01
    w2 = jax.random.normal(kw2, (DIM, HIDDEN), dtype=jnp.float32) * (1.0 / HIDDEN ** 0.5)
    b2 = jax.random.normal(kb2, (DIM,), dtype=jnp.float32) * 0.01

    # Reference in plain JAX (same math as the PyTorch module, dropout p=0).
    h_ref = x @ w1.T + b1
    h_ref = h_ref * jax.nn.sigmoid(h_ref)
    ref = h_ref @ w2.T + b2

    # Exact f32 path.
    out_f32 = jax.block_until_ready(
        feed_forward(x, w1, b1, w2, b2, compute_dtype=jnp.float32))
    assert out_f32.shape == ref.shape == (B, S, DIM)
    assert jnp.allclose(out_f32, ref, atol=1e-5, rtol=1e-5), "f32 mismatch vs reference"

    # Default path: bf16 MXU operands, f32 accumulation (looser tolerance).
    out_bf16 = jax.block_until_ready(feed_forward(x, w1, b1, w2, b2))
    assert out_bf16.shape == ref.shape
    assert jnp.allclose(out_bf16, ref, atol=1e-1, rtol=1e-1), "bf16 mismatch vs reference"

    print("KERNEL_OK")
</pallas_src>

<mosaic_0001>
module attributes {stable_mosaic.version = 11 : i64} {
  func.func @_ffn_kernel(%arg0: i32, %arg1: memref<8x32xf32, #tpu.memory_space<vmem>>, %arg2: memref<32x64xf32, #tpu.memory_space<vmem>>, %arg3: memref<1x64xf32, #tpu.memory_space<vmem>>, %arg4: memref<64x32xf32, #tpu.memory_space<vmem>>, %arg5: memref<1x32xf32, #tpu.memory_space<vmem>>, %arg6: memref<8x32xf32, #tpu.memory_space<vmem>>) attributes {dimension_semantics = [#tpu.dimension_semantics<parallel>], iteration_bounds = array<i64: 2>, scalar_prefetch = 0 : i64, scratch_operands = 0 : i64, tpu.core_type = #tpu.core_type<tc>, window_params = [{transform_indices = @transform_0, window_bounds = array<i64: 8, 32>}, {pipeline_mode = #tpu.pipeline_mode<synchronous>, transform_indices = @transform_1, window_bounds = array<i64: 32, 64>}, {pipeline_mode = #tpu.pipeline_mode<synchronous>, transform_indices = @transform_2, window_bounds = array<i64: 1, 64>}, {pipeline_mode = #tpu.pipeline_mode<synchronous>, transform_indices = @transform_3, window_bounds = array<i64: 64, 32>}, {pipeline_mode = #tpu.pipeline_mode<synchronous>, transform_indices = @transform_4, window_bounds = array<i64: 1, 32>}, {transform_indices = @transform_5, window_bounds = array<i64: 8, 32>}]} {
    %c0 = arith.constant 0 : index
    %c0_0 = arith.constant 0 : index
    %0 = vector.load %arg1[%c0, %c0_0] : memref<8x32xf32, #tpu.memory_space<vmem>>, vector<8x32xf32>
    %c0_1 = arith.constant 0 : index
    %c0_2 = arith.constant 0 : index
    %1 = vector.load %arg2[%c0_1, %c0_2] : memref<32x64xf32, #tpu.memory_space<vmem>>, vector<32x64xf32>
    %cst = arith.constant dense<0.000000e+00> : vector<8x64xf32>
    %2 = tpu.matmul %0, %1, %cst {dimension_numbers = #tpu.dot_dimension_numbers<[1], [0], [0], [1], [0, 0, 1, 1], [], []>} : vector<8x32xf32>, vector<32x64xf32>, vector<8x64xf32> -> vector<8x64xf32>
    %c0_3 = arith.constant 0 : index
    %c0_4 = arith.constant 0 : index
    %3 = vector.load %arg3[%c0_3, %c0_4] : memref<1x64xf32, #tpu.memory_space<vmem>>, vector<1x64xf32>
    %4 = vector.broadcast %3 : vector<1x64xf32> to vector<8x64xf32>
    %5 = arith.addf %2, %4 : vector<8x64xf32>
    %6 = arith.negf %5 : vector<8x64xf32>
    %7 = math.exp %6 : vector<8x64xf32>
    %cst_5 = arith.constant 1.000000e+00 : f32
    %8 = vector.broadcast %cst_5 : f32 to vector<8x64xf32>
    %9 = arith.addf %8, %7 : vector<8x64xf32>
    %10 = arith.divf %8, %9 : vector<8x64xf32>
    %11 = arith.mulf %5, %10 : vector<8x64xf32>
    %c0_6 = arith.constant 0 : index
    %c0_7 = arith.constant 0 : index
    %12 = vector.load %arg4[%c0_6, %c0_7] : memref<64x32xf32, #tpu.memory_space<vmem>>, vector<64x32xf32>
    %cst_8 = arith.constant dense<0.000000e+00> : vector<8x32xf32>
    %13 = tpu.matmul %11, %12, %cst_8 {dimension_numbers = #tpu.dot_dimension_numbers<[1], [0], [0], [1], [0, 0, 1, 1], [], []>} : vector<8x64xf32>, vector<64x32xf32>, vector<8x32xf32> -> vector<8x32xf32>
    %c0_9 = arith.constant 0 : index
    %c0_10 = arith.constant 0 : index
    %14 = vector.load %arg5[%c0_9, %c0_10] : memref<1x32xf32, #tpu.memory_space<vmem>>, vector<1x32xf32>
    %15 = vector.broadcast %14 : vector<1x32xf32> to vector<8x32xf32>
    %16 = arith.addf %13, %15 : vector<8x32xf32>
    %c0_11 = arith.constant 0 : index
    %c0_12 = arith.constant 0 : index
    %17 = vector.load %arg6[%c0_11, %c0_12] : memref<8x32xf32, #tpu.memory_space<vmem>>, vector<8x32xf32>
    tpu.vector_store %arg6[%c0_11, %c0_12], %16 {strides = array<i32>} : memref<8x32xf32, #tpu.memory_space<vmem>>, vector<8x32xf32>,
    return
  }
  func.func @transform_0(%arg0: i32) -> (i32, i32) {
    %c0_i32 = arith.constant 0 : i32
    %c0_i32_0 = arith.constant 0 : i32
    return %arg0, %c0_i32 : i32, i32
  }
  func.func @transform_1(%arg0: i32) -> (i32, i32) {
    %c0_i32 = arith.constant 0 : i32
    %c0_i32_0 = arith.constant 0 : i32
    %c0_i32_1 = arith.constant 0 : i32
    return %c0_i32, %c0_i32_0 : i32, i32
  }
  func.func @transform_2(%arg0: i32) -> (i32, i32) {
    %c0_i32 = arith.constant 0 : i32
    %c0_i32_0 = arith.constant 0 : i32
    %c0_i32_1 = arith.constant 0 : i32
    return %c0_i32, %c0_i32_0 : i32, i32
  }
  func.func @transform_3(%arg0: i32) -> (i32, i32) {
    %c0_i32 = arith.constant 0 : i32
    %c0_i32_0 = arith.constant 0 : i32
    %c0_i32_1 = arith.constant 0 : i32
    return %c0_i32, %c0_i32_0 : i32, i32
  }
  func.func @transform_4(%arg0: i32) -> (i32, i32) {
    %c0_i32 = arith.constant 0 : i32
    %c0_i32_0 = arith.constant 0 : i32
    %c0_i32_1 = arith.constant 0 : i32
    return %c0_i32, %c0_i32_0 : i32, i32
  }
  func.func @transform_5(%arg0: i32) -> (i32, i32) {
    %c0_i32 = arith.constant 0 : i32
    %c0_i32_0 = arith.constant 0 : i32
    return %arg0, %c0_i32 : i32, i32
  }
}

module attributes {stable_mosaic.version = 11 : i64} {
  func.func @_ffn_kernel(%arg0: i32, %arg1: memref<8x32xf32, #tpu.memory_space<vmem>>, %arg2: memref<32x64xf32, #tpu.memory_space<vmem>>, %arg3: memref<1x64xf32, #tpu.memory_space<vmem>>, %arg4: memref<64x32xf32, #tpu.memory_space<vmem>>, %arg5: memref<1x32xf32, #tpu.memory_space<vmem>>, %arg6: memref<8x32xf32, #tpu.memory_space<vmem>>) attributes {dimension_semantics = [#tpu.dimension_semantics<parallel>], iteration_bounds = array<i64: 2>, scalar_prefetch = 0 : i64, scratch_operands = 0 : i64, tpu.core_type = #tpu.core_type<tc>, window_params = [{transform_indices = @transform_0, window_bounds = array<i64: 8, 32>}, {pipeline_mode = #tpu.pipeline_mode<synchronous>, transform_indices = @transform_1, window_bounds = array<i64: 32, 64>}, {pipeline_mode = #tpu.pipeline_mode<synchronous>, transform_indices = @transform_2, window_bounds = array<i64: 1, 64>}, {pipeline_mode = #tpu.pipeline_mode<synchronous>, transform_indices = @transform_3, window_bounds = array<i64: 64, 32>}, {pipeline_mode = #tpu.pipeline_mode<synchronous>, transform_indices = @transform_4, window_bounds = array<i64: 1, 32>}, {transform_indices = @transform_5, window_bounds = array<i64: 8, 32>}]} {
    %c0 = arith.constant 0 : index
    %c0_0 = arith.constant 0 : index
    %0 = vector.load %arg1[%c0, %c0_0] : memref<8x32xf32, #tpu.memory_space<vmem>>, vector<8x32xf32>
    %c0_1 = arith.constant 0 : index
    %c0_2 = arith.constant 0 : index
    %1 = vector.load %arg2[%c0_1, %c0_2] : memref<32x64xf32, #tpu.memory_space<vmem>>, vector<32x64xf32>
    %cst = arith.constant dense<0.000000e+00> : vector<8x64xf32>
    %2 = tpu.matmul %0, %1, %cst {dimension_numbers = #tpu.dot_dimension_numbers<[1], [0], [0], [1], [0, 0, 1, 1], [], []>} : vector<8x32xf32>, vector<32x64xf32>, vector<8x64xf32> -> vector<8x64xf32>
    %c0_3 = arith.constant 0 : index
    %c0_4 = arith.constant 0 : index
    %3 = vector.load %arg3[%c0_3, %c0_4] : memref<1x64xf32, #tpu.memory_space<vmem>>, vector<1x64xf32>
    %4 = vector.broadcast %3 : vector<1x64xf32> to vector<8x64xf32>
    %5 = arith.addf %2, %4 : vector<8x64xf32>
    %6 = arith.negf %5 : vector<8x64xf32>
    %7 = math.exp %6 : vector<8x64xf32>
    %cst_5 = arith.constant 1.000000e+00 : f32
    %8 = vector.broadcast %cst_5 : f32 to vector<8x64xf32>
    %9 = arith.addf %8, %7 : vector<8x64xf32>
    %10 = arith.divf %8, %9 : vector<8x64xf32>
    %11 = arith.mulf %5, %10 : vector<8x64xf32>
    %c0_6 = arith.constant 0 : index
    %c0_7 = arith.constant 0 : index
    %12 = vector.load %arg4[%c0_6, %c0_7] : memref<64x32xf32, #tpu.memory_space<vmem>>, vector<64x32xf32>
    %cst_8 = arith.constant dense<0.000000e+00> : vector<8x32xf32>
    %13 = tpu.matmul %11, %12, %cst_8 {dimension_numbers = #tpu.dot_dimension_numbers<[1], [0], [0], [1], [0, 0, 1, 1], [], []>} : vector<8x64xf32>, vector<64x32xf32>, vector<8x32xf32> -> vector<8x32xf32>
    %c0_9 = arith.constant 0 : index
    %c0_10 = arith.constant 0 : index
    %14 = vector.load %arg5[%c0_9, %c0_10] : memref<1x32xf32, #tpu.memory_space<vmem>>, vector<1x32xf32>
    %15 = vector.broadcast %14 : vector<1x32xf32> to vector<8x32xf32>
    %16 = arith.addf %13, %15 : vector<8x32xf32>
    %c0_11 = arith.constant 0 : index
    %c0_12 = arith.constant 0 : index
    %17 = vector.load %arg6[%c0_11, %c0_12] : memref<8x32xf32, #tpu.memory_space<vmem>>, vector<8x32xf32>
    tpu.vector_store %arg6[%c0_11, %c0_12], %16 {strides = array<i32>} : memref<8x32xf32, #tpu.memory_space<vmem>>, vector<8x32xf32>,
    return
  }
  func.func @transform_0(%arg0: i32) -> (i32, i32) {
    %c0_i32 = arith.constant 0 : i32
    %c0_i32_0 = arith.constant 0 : i32
    return %arg0, %c0_i32 : i32, i32
  }
  func.func @transform_1(%arg0: i32) -> (i32, i32) {
    %c0_i32 = arith.constant 0 : i32
    %c0_i32_0 = arith.constant 0 : i32
    %c0_i32_1 = arith.constant 0 : i32
    return %c0_i32, %c0_i32_0 : i32, i32
  }
  func.func @transform_2(%arg0: i32) -> (i32, i32) {
    %c0_i32 = arith.constant 0 : i32
    %c0_i32_0 = arith.constant 0 : i32
    %c0_i32_1 = arith.constant 0 : i32
    return %c0_i32, %c0_i32_0 : i32, i32
  }
  func.func @transform_3(%arg0: i32) -> (i32, i32) {
    %c0_i32 = arith.constant 0 : i32
    %c0_i32_0 = arith.constant 0 : i32
    %c0_i32_1 = arith.constant 0 : i32
    return %c0_i32, %c0_i32_0 : i32, i32
  }
  func.func @transform_4(%arg0: i32) -> (i32, i32) {
    %c0_i32 = arith.constant 0 : i32
    %c0_i32_0 = arith.constant 0 : i32
    %c0_i32_1 = arith.constant 0 : i32
    return %c0_i32, %c0_i32_0 : i32, i32
  }
  func.func @transform_5(%arg0: i32) -> (i32, i32) {
    %c0_i32 = arith.constant 0 : i32
    %c0_i32_0 = arith.constant 0 : i32
    return %arg0, %c0_i32 : i32, i32
  }
}

</mosaic_0001>

<llo_original>
// kernel: feed_forward_prepared.1
$region0: #{feed_forward_prepared.1}
  #allocation0 [shape = 'u32[]', space=smem, size = 0x4, offset = 0x4, fixed_abs, tag = 'smem constant byte address 0x4 - core index']
  #allocation1 [shape = 'u32[72,128]{1,0:T(1,128)}', space=vmem, size = 0x9000, scoped, tag = 'internal scratch']
  %s0 = inlined_call_operand.vmem [shape: f32[16,32], index: 0, kind: input, shape index: {}]
  %s1 = inlined_call_operand.vmem [shape: f32[32,64], index: 1, kind: input, shape index: {}]
  %s2 = inlined_call_operand.vmem [shape: f32[1,64], index: 2, kind: input, shape index: {}]
  %s3 = inlined_call_operand.vmem [shape: f32[64,32], index: 3, kind: input, shape index: {}]
  %s4 = inlined_call_operand.vmem [shape: f32[1,32], index: 4, kind: input, shape index: {}]
  %s5 = inlined_call_operand.hbm [shape: f32[16,32], index: 5, kind: output, shape index: {}]
  %s6 = sld [smem:[#allocation0]]
  $region53: #{feed_forward_prepared.1} parent=0
    _
  %s8 = ssub.s32 1, %s6
  %s9 = scalar_select 0, %s8, %s6
  $region1: #{feed_forward_prepared.1} parent=0
    #allocation2 [shape = 'u8[8192]{0}', space=vmem, size = 0x2000, scoped, tag = 'output window, operand 0']
    #allocation3 [shape = 's32[2]{0}', space=sflag, size = 0x8, scoped, tag = 'scoped memory for feed_forward_prepared.1']
    %10 = vsyncpa [#allocation3], 0
    %s11 = scalar_lea.sflag [#allocation3], 1
    %12 = vsyncpa %s11, 0
    loop: start=0, step=1, limit=4
    $region2: #{feed_forward_prepared.1} parent=1 // loop_pre_header
      _
    $region3: #{feed_forward_prepared.1} parent=1 // loop_header
      %s14 = sphi 0, %s18
      %p15 = scmp.ge.s32.totalorder %s14, 4
      %s24 = sphi 0, %s26
      %s27 = sphi 0, %s24
      %s28 = sphi 0, %s27
      %s44 = sphi 0, %s28
      %s48 = sphi 0, %s48
      %s50 = sphi 0, %s48
      %s51 = sphi 0, %s50
      %s65 = sphi 0, %s51
      %s69 = sphi 0, %s69
      %s71 = sphi 0, %s69
      %s72 = sphi 0, %s71
      %s86 = sphi 0, %s72
      %s90 = sphi 0, %s90
      %s92 = sphi 0, %s90
      %s93 = sphi 0, %s92
      %s107 = sphi 0, %s93
      %s111 = sphi 0, %s111
      %s113 = sphi 0, %s111
      %s114 = sphi 0, %s113
      %s128 = sphi 0, %s114
      %s134 = sphi 0, %s136
      %s137 = sphi 0, %s134
      %s138 = sphi 0, %s137
      %s154 = sphi 0, %s138
    $region4: #{feed_forward_prepared.1} parent=1 // loop_header_branch
      %17 = sbr.rel (%p15) target = $region8
    $region5: #{feed_forward_prepared.1} parent=1 // loop_body
      %s19 = ssub.s32 %s14, 1
      %s20 = ssub.s32 %s14, 2
      %s21 = sadd.s32 %s14, 1
      %s22 = ssub.s32 %s14, %s21
      %p23 = scmp.eq.s32.totalorder %s22, 0
      %s25 = sadd.s32 %s24, 1
      %s26 = scalar_select %p23, %s24, %s25
      %p29 = pneg %p23
      %p30 = scmp.eq.s32.totalorder %s14, 1
      %p31 = por %p29, %p30
      %p32 = scmp.ne.s32.totalorder %s24, %s27
      %p33 = scmp.eq.s32.totalorder %s14, 0
      %p34 = por %p32, %p33
      %p35 = scmp.ne.s32.totalorder %s24, %s27
      %p36 = scmp.eq.s32.totalorder %s19, 1
      %p37 = por %p35, %p36
      %p38 = scmp.ne.s32.totalorder %s27, %s28
      %p39 = scmp.eq.s32.totalorder %s19, 0
      %p40 = por %p38, %p39
      %p41 = scmp.ne.s32.totalorder %s27, %s28
      %p42 = scmp.eq.s32.totalorder %s20, 1
      %p43 = por %p41, %p42
      %p45 = scmp.ne.s32.totalorder %s28, %s44
      %p46 = scmp.eq.s32.totalorder %s20, 0
      %p47 = por %p45, %p46
      %s49 = sadd.s32 %s48, 1
      %p52 = scmp.eq.s32.totalorder %s14, 1
      %p53 = scmp.ne.s32.totalorder %s48, %s50
      %p54 = scmp.eq.s32.totalorder %s14, 0
      %p55 = por %p53, %p54
      %p56 = scmp.ne.s32.totalorder %s48, %s50
      %p57 = scmp.eq.s32.totalorder %s19, 1
      %p58 = por %p56, %p57
      %p59 = scmp.ne.s32.totalorder %s50, %s51
      %p60 = scmp.eq.s32.totalorder %s19, 0
      %p61 = por %p59, %p60
      %p62 = scmp.ne.s32.totalorder %s50, %s51
      %p63 = scmp.eq.s32.totalorder %s20, 1
      %p64 = por %p62, %p63
      %p66 = scmp.ne.s32.totalorder %s51, %s65
      %p67 = scmp.eq.s32.totalorder %s20, 0
      %p68 = por %p66, %p67
      %s70 = sadd.s32 %s69, 1
      %p73 = scmp.eq.s32.totalorder %s14, 1
      %p74 = scmp.ne.s32.totalorder %s69, %s71
      %p75 = scmp.eq.s32.totalorder %s14, 0
      %p76 = por %p74, %p75
      %p77 = scmp.ne.s32.totalorder %s69, %s71
      %p78 = scmp.eq.s32.totalorder %s19, 1
      %p79 = por %p77, %p78
      %p80 = scmp.ne.s32.totalorder %s71, %s72
      %p81 = scmp.eq.s32.totalorder %s19, 0
      %p82 = por %p80, %p81
      %p83 = scmp.ne.s32.totalorder %s71, %s72
      %p84 = scmp.eq.s32.totalorder %s20, 1
      %p85 = por %p83, %p84
      %p87 = scmp.ne.s32.totalorder %s72, %s86
      %p88 = scmp.eq.s32.totalorder %s20, 0
      %p89 = por %p87, %p88
      %s91 = sadd.s32 %s90, 1
      %p94 = scmp.eq.s32.totalorder %s14, 1
      %p95 = scmp.ne.s32.totalorder %s90, %s92
      %p96 = scmp.eq.s32.totalorder %s14, 0
      %p97 = por %p95, %p96
      %p98 = scmp.ne.s32.totalorder %s90, %s92
      %p99 = scmp.eq.s32.totalorder %s19, 1
      %p100 = por %p98, %p99
      %p101 = scmp.ne.s32.totalorder %s92, %s93
      %p102 = scmp.eq.s32.totalorder %s19, 0
      %p103 = por %p101, %p102
      %p104 = scmp.ne.s32.totalorder %s92, %s93
      %p105 = scmp.eq.s32.totalorder %s20, 1
      %p106 = por %p104, %p105
      %p108 = scmp.ne.s32.totalorder %s93, %s107
      %p109 = scmp.eq.s32.totalorder %s20, 0
      %p110 = por %p108, %p109
      %s112 = sadd.s32 %s111, 1
      %p115 = scmp.eq.s32.totalorder %s14, 1
      %p116 = scmp.ne.s32.totalorder %s111, %s113
      %p117 = scmp.eq.s32.totalorder %s14, 0
      %p118 = por %p116, %p117
      %p119 = scmp.ne.s32.totalorder %s111, %s113
      %p120 = scmp.eq.s32.totalorder %s19, 1
      %p121 = por %p119, %p120
      %p122 = scmp.ne.s32.totalorder %s113, %s114
      %p123 = scmp.eq.s32.totalorder %s19, 0
      %p124 = por %p122, %p123
      %p125 = scmp.ne.s32.totalorder %s113, %s114
      %p126 = scmp.eq.s32.totalorder %s20, 1
      %p127 = por %p125, %p126
      %p129 = scmp.ne.s32.totalorder %s114, %s128
      %p130 = scmp.eq.s32.totalorder %s20, 0
      %p131 = por %p129, %p130
      %s132 = ssub.s32 %s14, %s21
      %p133 = scmp.eq.s32.totalorder %s132, 0
      %s135 = sadd.s32 %s134, 1
      %s136 = scalar_select %p133, %s134, %s135
      %p139 = pneg %p133
      %p140 = scmp.eq.s32.totalorder %s14, 1
      %p141 = por %p139, %p140
      %p142 = scmp.ne.s32.totalorder %s134, %s137
      %p143 = scmp.eq.s32.totalorder %s14, 0
      %p144 = por %p142, %p143
      %p145 = scmp.ne.s32.totalorder %s134, %s137
      %p146 = scmp.eq.s32.totalorder %s19, 1
      %p147 = por %p145, %p146
      %p148 = scmp.ne.s32.totalorder %s137, %s138
      %p149 = scmp.eq.s32.totalorder %s19, 0
      %p150 = por %p148, %p149
      %p151 = scmp.ne.s32.totalorder %s137, %s138
      %p152 = scmp.eq.s32.totalorder %s20, 1
      %p153 = por %p151, %p152
      %p155 = scmp.ne.s32.totalorder %s138, %s154
      %p156 = scmp.eq.s32.totalorder %s20, 0
      %p157 = por %p155, %p156
      %p158 = scmp.le.s32.totalorder 1, %s14
      %p159 = scmp.lt.s32.totalorder %s14, 3
      %p160 = pnand %p158, %p159
      %p161 = pneg %p160
      // Predicated region
      $region9: #{feed_forward_prepared.1} parent=5 // pred_check
        _
      $region10: #{feed_forward_prepared.1} parent=5 // pred_check_branch
        %163 = sbr.rel (%p160) target = $region12
      $region11: #{feed_forward_prepared.1} parent=5 // pred_region
        %s164 = ssub.s32 %s14, 1
        // Predicated region
        $region13: #{feed_forward_prepared.1} parent=11 // pred_check
          %p165 = pneg %p61
        $region14: #{feed_forward_prepared.1} parent=11 // pred_check_branch
          %167 = sbr.rel (%p165) target = $region16
        $region15: #{feed_forward_prepared.1} parent=11 // pred_region
          _
        $region16: #{feed_forward_prepared.1} parent=11 // pred_fallthru
          _
        // Predicated region
        $region17: #{feed_forward_prepared.1} parent=11 // pred_check
          %p168 = pneg %p82
        $region18: #{feed_forward_prepared.1} parent=11 // pred_check_branch
          %170 = sbr.rel (%p168) target = $region20
        $region19: #{feed_forward_prepared.1} parent=11 // pred_region
          _
        $region20: #{feed_forward_prepared.1} parent=11 // pred_fallthru
          _
        // Predicated region
        $region21: #{feed_forward_prepared.1} parent=11 // pred_check
          %p171 = pneg %p103
        $region22: #{feed_forward_prepared.1} parent=11 // pred_check_branch
          %173 = sbr.rel (%p171) target = $region24
        $region23: #{feed_forward_prepared.1} parent=11 // pred_region
          _
        $region24: #{feed_forward_prepared.1} parent=11 // pred_fallthru
          _
        // Predicated region
        $region25: #{feed_forward_prepared.1} parent=11 // pred_check
          %p174 = pneg %p124
        $region26: #{feed_forward_prepared.1} parent=11 // pred_check_branch
          %176 = sbr.rel (%p174) target = $region28
        $region27: #{feed_forward_prepared.1} parent=11 // pred_region
          _
        $region28: #{feed_forward_prepared.1} parent=11 // pred_fallthru
          _
      $region12: #{feed_forward_prepared.1} parent=5 // pred_fallthru
        _
      %p177 = scmp.lt.s32.totalorder %s14, 2
      // Predicated region
      $region29: #{feed_forward_prepared.1} parent=5 // pred_check
        %p178 = pneg %p177
      $region30: #{feed_forward_prepared.1} parent=5 // pred_check_branch
        %180 = sbr.rel (%p178) target = $region32
      $region31: #{feed_forward_prepared.1} parent=5 // pred_region
        // Predicated region
        $region33: #{feed_forward_prepared.1} parent=31 // pred_check
          %p181 = pneg %p34
        $region34: #{feed_forward_prepared.1} parent=31 // pred_check_branch
          %183 = sbr.rel (%p181) target = $region36
        $region35: #{feed_forward_prepared.1} parent=31 // pred_region
          %p184 = scmp.lt.s32.totalorder %s14, 1
          %s185 = scalar_select %p184, %s14, 1
          %s186 = smul.addr %s185, 8
          %s187 = scalar_lea.vmem %s0, %s186
        $region36: #{feed_forward_prepared.1} parent=31 // pred_fallthru
          _
      $region32: #{feed_forward_prepared.1} parent=5 // pred_fallthru
        _
      %p188 = scmp.le.s32.totalorder 1, %s14
      %p189 = scmp.lt.s32.totalorder %s14, 3
      %p190 = pnand %p188, %p189
      %p191 = pneg %p190
      // Predicated region
      $region37: #{feed_forward_prepared.1} parent=5 // pred_check
        _
      $region38: #{feed_forward_prepared.1} parent=5 // pred_check_branch
        %193 = sbr.rel (%p190) target = $region40
      $region39: #{feed_forward_prepared.1} parent=5 // pred_region
        %s194 = ssub.s32 %s14, 1
        %p195 = scmp.lt.s32.totalorder %s19, 1
        %s196 = scalar_select %p195, %s19, 1
        %s197 = smul.addr %s196, 8
        %s198 = scalar_lea.vmem %s0, %s197
        %p199 = pneg %p40
        %p200 = pneg %p37
        %p201 = pneg %p61
        %p202 = pneg %p58
        %p203 = pneg %p82
        %p204 = pneg %p79
        %p205 = pneg %p103
        %p206 = pneg %p100
        %p207 = pneg %p124
        %p208 = pneg %p121
        %p209 = pneg %p150
        %p210 = pneg %p147
        %s211 = sand.u32 %s137, 1
        %s212 = scalar_lea.sflag [#allocation3], %s211
        %s213 = sand.u32 %s137, 1
        %s214 = smul.addr %s213, 8
        %s215 = scalar_lea.vmem [#allocation2], %s214
        %p216 = scmp.lt.s32.totalorder %s19, 1
        %s217 = scalar_select %p216, %s19, 1
        %s218 = smul.addr %s217, 8
        %s219 = scalar_lea.vmem %s0, %s218
        %v220 = vld [vmem:[%s219] sm:$0xff]
        %v221 = vld [vmem:[%s1] sm:$0xff]
        %v222 = vld [vmem:[%s1 + $0x8] sm:$0xff]
        %v223 = vld [vmem:[%s1 + $0x10] sm:$0xff]
        %v224 = vld [vmem:[%s1 + $0x18] sm:$0xff]
        %v225 = vld [vmem:[%s2] sm:$0x1]
        %v227 = vperm.slane %v225, 0
        %vm229 = vcmask 261120
        %v231 = vsel %vm229, %v220, 0
        %233 = vmatpush.msra.mxu0 0.0
        %234 = vmatpush.msra.mxu0 0.0
        %235 = vmatpush.msra.mxu0 0.0
        %236 = vmatpush.msra.mxu0 0.0
        %237 = vmatpush.msra.mxu0 0.0
        %238 = vmatpush.msra.mxu0 0.0
        %239 = vmatpush.msra.mxu0 0.0
        %240 = vmatpush.msra.mxu0 0.0
        %241 = vmatpush.msra.mxu0 0.0
        %242 = vmatpush.msra.mxu0 0.0
        %243 = vmatpush.msra.mxu0 0.0
        %244 = vmatpush.msra.mxu0 0.0
        %245 = vmatpush.msra.mxu0 %v224
        %246 = vmatpush.msra.mxu0 %v223
        %247 = vmatpush.msra.mxu0 %v222
        %248 = vmatpush.msra.mxu0 %v221
        %249 = vmatmul.f32.gmra.mxu0 %v231
        %v250 = vpop.f32.mrf.mxu0
        %v251 = vadd.f32 %v227, %v250
        %252 = vdwg.mxu0
        %v253 = vxor.u32 %v251, 2147483648
        %v254 = vmul.f32 %v253, 1.442695
        %v255 = vpow.pop %v254
        %v256 = vadd.f32 %v255, 1.0
        %v257 = vrcp.pop %v256
        %v258 = vmul.f32 %v256, %v257
        %v259 = vsub.f32 1.0, %v258
        %v260 = vmul.f32 %v257, %v259
        %v261 = vadd.f32 %v257, %v260
        %vm262 = vweird.f32 %v256
        %vm263 = vweird.f32 %v257
        %vm264 = vmor %vm262, %vm263
        %v265 = vsel %vm264, %v257, %v261
        %v266 = vand.u32 2147483647, %v256
        %vm267 = vcmp.eq.f32.partialorder %v266, 8.507059e+37
        %v268 = vand.u32 %v256, 2147483648
        %v269 = vor.u32 1.1754944e-38, %v268
        %v270 = vsel %vm267, %v269, %v265
        %v271 = vmul.f32 1.0, %v270
        %v272 = vmul.f32 %v251, %v271
        %v273 = vld [vmem:[%s3] sm:$0xff]
        %v274 = vld [vmem:[%s3 + $0x8] sm:$0xff]
        %v275 = vld [vmem:[%s3 + $0x10] sm:$0xff]
        %v276 = vld [vmem:[%s3 + $0x18] sm:$0xff]
        %v277 = vld [vmem:[%s3 + $0x20] sm:$0xff]
        %v278 = vld [vmem:[%s3 + $0x28] sm:$0xff]
        %v279 = vld [vmem:[%s3 + $0x30] sm:$0xff]
        %v280 = vld [vmem:[%s3 + $0x38] sm:$0xff]
        %v281 = vld [vmem:[%s4] sm:$0x1]
        %v283 = vperm.slane %v281, 0
        %vm285 = vcmask 523264
        %v287 = vsel %vm285, %v272, 0
        %289 = vmatpush.msra.mxu0 0.0
        %290 = vmatpush.msra.mxu0 0.0
        %291 = vmatpush.msra.mxu0 0.0
        %292 = vmatpush.msra.mxu0 0.0
        %293 = vmatpush.msra.mxu0 0.0
        %294 = vmatpush.msra.mxu0 0.0
        %295 = vmatpush.msra.mxu0 0.0
        %296 = vmatpush.msra.mxu0 0.0
        %297 = vmatpush.msra.mxu0 %v280
        %298 = vmatpush.msra.mxu0 %v279
        %299 = vmatpush.msra.mxu0 %v278
        %300 = vmatpush.msra.mxu0 %v277
        %301 = vmatpush.msra.mxu0 %v276
        %302 = vmatpush.msra.mxu0 %v275
        %303 = vmatpush.msra.mxu0 %v274
        %304 = vmatpush.msra.mxu0 %v273
        %305 = vmatmul.f32.gmra.mxu0 %v287
        %v306 = vpop.f32.mrf.mxu0
        %v307 = vadd.f32 %v283, %v306
        %308 = vdwg.mxu0
        %309 = vst.msk [vmem:[%s215] sm:$0xff] %vm229, %v307
        %s310 = sand.u32 %s137, 1
        %s311 = scalar_lea.sflag [#allocation3], %s310
        %s312 = sand.u32 %s137, 1
        %s313 = smul.addr %s312, 8
        %s314 = scalar_lea.vmem [#allocation2], %s313
        // Predicated region
        $region41: #{feed_forward_prepared.1} parent=39 // pred_check
          %p315 = pneg %p147
        $region42: #{feed_forward_prepared.1} parent=39 // pred_check_branch
          %317 = sbr.rel (%p315) target = $region44
        $region43: #{feed_forward_prepared.1} parent=39 // pred_region
          %319 = vsyncadd %s311, 0
          %s320 = smul.addr %s19, 8
          %s321 = scalar_lea.hbm %s5, %s320
          %s323 = sshll.u32 %s314, 4
          %s324 = int_to_ptr.vmem [resolvable:$true] %s323
          %s325 = sshll.u32 %s321, 4
          %s326 = int_to_ptr.hbm [resolvable:$true] %s325
          %328 = dma.vmem_to_hbm [thread:$0]  %s324, 128, %s326, %s311
        $region44: #{feed_forward_prepared.1} parent=39 // pred_fallthru
          _
      $region40: #{feed_forward_prepared.1} parent=5 // pred_fallthru
        _
      %p329 = scmp.le.s32.totalorder 2, %s14
      // Predicated region
      $region45: #{feed_forward_prepared.1} parent=5 // pred_check
        %p330 = pneg %p329
      $region46: #{feed_forward_prepared.1} parent=5 // pred_check_branch
        %332 = sbr.rel (%p330) target = $region48
      $region47: #{feed_forward_prepared.1} parent=5 // pred_region
        %s333 = ssub.s32 %s14, 2
        // Predicated region
        $region49: #{feed_forward_prepared.1} parent=47 // pred_check
          %p334 = pneg %p153
        $region50: #{feed_forward_prepared.1} parent=47 // pred_check_branch
          %336 = sbr.rel (%p334) target = $region52
        $region51: #{feed_forward_prepared.1} parent=47 // pred_region
          %s337 = sand.u32 %s138, 1
          %s338 = scalar_lea.sflag [#allocation3], %s337
          %s339 = sand.u32 %s138, 1
          %s340 = smul.addr %s339, 8
          %s341 = scalar_lea.vmem [#allocation2], %s340
          %343 = dma.done %s338, 128
        $region52: #{feed_forward_prepared.1} parent=47 // pred_fallthru
          _
      $region48: #{feed_forward_prepared.1} parent=5 // pred_fallthru
        _
    $region6: #{feed_forward_prepared.1} parent=1 // loop_footer
      %s18 = sadd.s32 1, %s14
    $region7: #{feed_forward_prepared.1} parent=1 // loop_footer_branch
      %13 = sbr.rel target = $region3
    $region8: #{feed_forward_prepared.1} parent=1 // loop_exit
      _
    %344 = vsyncpa [#allocation3], 1
    %s345 = scalar_lea.sflag [#allocation3], 1
    %346 = vsyncpa %s345, 1

// kernel: feed_forward_prepared.1
$region0: #{feed_forward_prepared.1}
  #allocation0 [shape = 'u32[]', space=smem, size = 0x4, offset = 0x4, fixed_abs, tag = 'smem constant byte address 0x4 - core index']
  #allocation1 [shape = 'u32[72,128]{1,0:T(1,128)}', space=vmem, size = 0x9000, scoped, tag = 'internal scratch']
  %s0 = inlined_call_operand.vmem [shape: f32[16,32], index: 0, kind: input, shape index: {}]
  %s1 = inlined_call_operand.vmem [shape: f32[32,64], index: 1, kind: input, shape index: {}]
  %s2 = inlined_call_operand.vmem [shape: f32[1,64], index: 2, kind: input, shape index: {}]
  %s3 = inlined_call_operand.vmem [shape: f32[64,32], index: 3, kind: input, shape index: {}]
  %s4 = inlined_call_operand.vmem [shape: f32[1,32], index: 4, kind: input, shape index: {}]
  %s5 = inlined_call_operand.hbm [shape: f32[16,32], index: 5, kind: output, shape index: {}]
  %s6 = sld [smem:[#allocation0]]
  $region53: #{feed_forward_prepared.1} parent=0
    _
  %s8 = ssub.s32 1, %s6
  %s9 = scalar_select 0, %s8, %s6
  $region1: #{feed_forward_prepared.1} parent=0
    #allocation2 [shape = 'u8[8192]{0}', space=vmem, size = 0x2000, scoped, tag = 'output window, operand 0']
    #allocation3 [shape = 's32[2]{0}', space=sflag, size = 0x8, scoped, tag = 'scoped memory for feed_forward_prepared.1']
    %10 = vsyncpa [#allocation3], 0
    %s11 = scalar_lea.sflag [#allocation3], 1
    %12 = vsyncpa %s11, 0
    loop: start=0, step=1, limit=4
    $region2: #{feed_forward_prepared.1} parent=1 // loop_pre_header
      _
    $region3: #{feed_forward_prepared.1} parent=1 // loop_header
      %s14 = sphi 0, %s18
      %p15 = scmp.ge.s32.totalorder %s14, 4
      %s24 = sphi 0, %s26
      %s27 = sphi 0, %s24
      %s28 = sphi 0, %s27
      %s44 = sphi 0, %s28
      %s48 = sphi 0, %s48
      %s50 = sphi 0, %s48
      %s51 = sphi 0, %s50
      %s65 = sphi 0, %s51
      %s69 = sphi 0, %s69
      %s71 = sphi 0, %s69
      %s72 = sphi 0, %s71
      %s86 = sphi 0, %s72
      %s90 = sphi 0, %s90
      %s92 = sphi 0, %s90
      %s93 = sphi 0, %s92
      %s107 = sphi 0, %s93
      %s111 = sphi 0, %s111
      %s113 = sphi 0, %s111
      %s114 = sphi 0, %s113
      %s128 = sphi 0, %s114
      %s134 = sphi 0, %s136
      %s137 = sphi 0, %s134
      %s138 = sphi 0, %s137
      %s154 = sphi 0, %s138
    $region4: #{feed_forward_prepared.1} parent=1 // loop_header_branch
      %17 = sbr.rel (%p15) target = $region8
    $region5: #{feed_forward_prepared.1} parent=1 // loop_body
      %s19 = ssub.s32 %s14, 1
      %s20 = ssub.s32 %s14, 2
      %s21 = sadd.s32 %s14, 1
      %s22 = ssub.s32 %s14, %s21
      %p23 = scmp.eq.s32.totalorder %s22, 0
      %s25 = sadd.s32 %s24, 1
      %s26 = scalar_select %p23, %s24, %s25
      %p29 = pneg %p23
      %p30 = scmp.eq.s32.totalorder %s14, 1
      %p31 = por %p29, %p30
      %p32 = scmp.ne.s32.totalorder %s24, %s27
      %p33 = scmp.eq.s32.totalorder %s14, 0
      %p34 = por %p32, %p33
      %p35 = scmp.ne.s32.totalorder %s24, %s27
      %p36 = scmp.eq.s32.totalorder %s19, 1
      %p37 = por %p35, %p36
      %p38 = scmp.ne.s32.totalorder %s27, %s28
      %p39 = scmp.eq.s32.totalorder %s19, 0
      %p40 = por %p38, %p39
      %p41 = scmp.ne.s32.totalorder %s27, %s28
      %p42 = scmp.eq.s32.totalorder %s20, 1
      %p43 = por %p41, %p42
      %p45 = scmp.ne.s32.totalorder %s28, %s44
      %p46 = scmp.eq.s32.totalorder %s20, 0
      %p47 = por %p45, %p46
      %s49 = sadd.s32 %s48, 1
      %p52 = scmp.eq.s32.totalorder %s14, 1
      %p53 = scmp.ne.s32.totalorder %s48, %s50
      %p54 = scmp.eq.s32.totalorder %s14, 0
      %p55 = por %p53, %p54
      %p56 = scmp.ne.s32.totalorder %s48, %s50
      %p57 = scmp.eq.s32.totalorder %s19, 1
      %p58 = por %p56, %p57
      %p59 = scmp.ne.s32.totalorder %s50, %s51
      %p60 = scmp.eq.s32.totalorder %s19, 0
      %p61 = por %p59, %p60
      %p62 = scmp.ne.s32.totalorder %s50, %s51
      %p63 = scmp.eq.s32.totalorder %s20, 1
      %p64 = por %p62, %p63
      %p66 = scmp.ne.s32.totalorder %s51, %s65
      %p67 = scmp.eq.s32.totalorder %s20, 0
      %p68 = por %p66, %p67
      %s70 = sadd.s32 %s69, 1
      %p73 = scmp.eq.s32.totalorder %s14, 1
      %p74 = scmp.ne.s32.totalorder %s69, %s71
      %p75 = scmp.eq.s32.totalorder %s14, 0
      %p76 = por %p74, %p75
      %p77 = scmp.ne.s32.totalorder %s69, %s71
      %p78 = scmp.eq.s32.totalorder %s19, 1
      %p79 = por %p77, %p78
      %p80 = scmp.ne.s32.totalorder %s71, %s72
      %p81 = scmp.eq.s32.totalorder %s19, 0
      %p82 = por %p80, %p81
      %p83 = scmp.ne.s32.totalorder %s71, %s72
      %p84 = scmp.eq.s32.totalorder %s20, 1
      %p85 = por %p83, %p84
      %p87 = scmp.ne.s32.totalorder %s72, %s86
      %p88 = scmp.eq.s32.totalorder %s20, 0
      %p89 = por %p87, %p88
      %s91 = sadd.s32 %s90, 1
      %p94 = scmp.eq.s32.totalorder %s14, 1
      %p95 = scmp.ne.s32.totalorder %s90, %s92
      %p96 = scmp.eq.s32.totalorder %s14, 0
      %p97 = por %p95, %p96
      %p98 = scmp.ne.s32.totalorder %s90, %s92
      %p99 = scmp.eq.s32.totalorder %s19, 1
      %p100 = por %p98, %p99
      %p101 = scmp.ne.s32.totalorder %s92, %s93
      %p102 = scmp.eq.s32.totalorder %s19, 0
      %p103 = por %p101, %p102
      %p104 = scmp.ne.s32.totalorder %s92, %s93
      %p105 = scmp.eq.s32.totalorder %s20, 1
      %p106 = por %p104, %p105
      %p108 = scmp.ne.s32.totalorder %s93, %s107
      %p109 = scmp.eq.s32.totalorder %s20, 0
      %p110 = por %p108, %p109
      %s112 = sadd.s32 %s111, 1
      %p115 = scmp.eq.s32.totalorder %s14, 1
      %p116 = scmp.ne.s32.totalorder %s111, %s113
      %p117 = scmp.eq.s32.totalorder %s14, 0
      %p118 = por %p116, %p117
      %p119 = scmp.ne.s32.totalorder %s111, %s113
      %p120 = scmp.eq.s32.totalorder %s19, 1
      %p121 = por %p119, %p120
      %p122 = scmp.ne.s32.totalorder %s113, %s114
      %p123 = scmp.eq.s32.totalorder %s19, 0
      %p124 = por %p122, %p123
      %p125 = scmp.ne.s32.totalorder %s113, %s114
      %p126 = scmp.eq.s32.totalorder %s20, 1
      %p127 = por %p125, %p126
      %p129 = scmp.ne.s32.totalorder %s114, %s128
      %p130 = scmp.eq.s32.totalorder %s20, 0
      %p131 = por %p129, %p130
      %s132 = ssub.s32 %s14, %s21
      %p133 = scmp.eq.s32.totalorder %s132, 0
      %s135 = sadd.s32 %s134, 1
      %s136 = scalar_select %p133, %s134, %s135
      %p139 = pneg %p133
      %p140 = scmp.eq.s32.totalorder %s14, 1
      %p141 = por %p139, %p140
      %p142 = scmp.ne.s32.totalorder %s134, %s137
      %p143 = scmp.eq.s32.totalorder %s14, 0
      %p144 = por %p142, %p143
      %p145 = scmp.ne.s32.totalorder %s134, %s137
      %p146 = scmp.eq.s32.totalorder %s19, 1
      %p147 = por %p145, %p146
      %p148 = scmp.ne.s32.totalorder %s137, %s138
      %p149 = scmp.eq.s32.totalorder %s19, 0
      %p150 = por %p148, %p149
      %p151 = scmp.ne.s32.totalorder %s137, %s138
      %p152 = scmp.eq.s32.totalorder %s20, 1
      %p153 = por %p151, %p152
      %p155 = scmp.ne.s32.totalorder %s138, %s154
      %p156 = scmp.eq.s32.totalorder %s20, 0
      %p157 = por %p155, %p156
      %p158 = scmp.le.s32.totalorder 1, %s14
      %p159 = scmp.lt.s32.totalorder %s14, 3
      %p160 = pnand %p158, %p159
      %p161 = pneg %p160
      // Predicated region
      $region9: #{feed_forward_prepared.1} parent=5 // pred_check
        _
      $region10: #{feed_forward_prepared.1} parent=5 // pred_check_branch
        %163 = sbr.rel (%p160) target = $region12
      $region11: #{feed_forward_prepared.1} parent=5 // pred_region
        %s164 = ssub.s32 %s14, 1
        // Predicated region
        $region13: #{feed_forward_prepared.1} parent=11 // pred_check
          %p165 = pneg %p61
        $region14: #{feed_forward_prepared.1} parent=11 // pred_check_branch
          %167 = sbr.rel (%p165) target = $region16
        $region15: #{feed_forward_prepared.1} parent=11 // pred_region
          _
        $region16: #{feed_forward_prepared.1} parent=11 // pred_fallthru
          _
        // Predicated region
        $region17: #{feed_forward_prepared.1} parent=11 // pred_check
          %p168 = pneg %p82
        $region18: #{feed_forward_prepared.1} parent=11 // pred_check_branch
          %170 = sbr.rel (%p168) target = $region20
        $region19: #{feed_forward_prepared.1} parent=11 // pred_region
          _
        $region20: #{feed_forward_prepared.1} parent=11 // pred_fallthru
          _
        // Predicated region
        $region21: #{feed_forward_prepared.1} parent=11 // pred_check
          %p171 = pneg %p103
        $region22: #{feed_forward_prepared.1} parent=11 // pred_check_branch
          %173 = sbr.rel (%p171) target = $region24
        $region23: #{feed_forward_prepared.1} parent=11 // pred_region
          _
        $region24: #{feed_forward_prepared.1} parent=11 // pred_fallthru
          _
        // Predicated region
        $region25: #{feed_forward_prepared.1} parent=11 // pred_check
          %p174 = pneg %p124
        $region26: #{feed_forward_prepared.1} parent=11 // pred_check_branch
          %176 = sbr.rel (%p174) target = $region28
        $region27: #{feed_forward_prepared.1} parent=11 // pred_region
          _
        $region28: #{feed_forward_prepared.1} parent=11 // pred_fallthru
          _
      $region12: #{feed_forward_prepared.1} parent=5 // pred_fallthru
        _
      %p177 = scmp.lt.s32.totalorder %s14, 2
      // Predicated region
      $region29: #{feed_forward_prepared.1} parent=5 // pred_check
        %p178 = pneg %p177
      $region30: #{feed_forward_prepared.1} parent=5 // pred_check_branch
        %180 = sbr.rel (%p178) target = $region32
      $region31: #{feed_forward_prepared.1} parent=5 // pred_region
        // Predicated region
        $region33: #{feed_forward_prepared.1} parent=31 // pred_check
          %p181 = pneg %p34
        $region34: #{feed_forward_prepared.1} parent=31 // pred_check_branch
          %183 = sbr.rel (%p181) target = $region36
        $region35: #{feed_forward_prepared.1} parent=31 // pred_region
          %p184 = scmp.lt.s32.totalorder %s14, 1
          %s185 = scalar_select %p184, %s14, 1
          %s186 = smul.addr %s185, 8
          %s187 = scalar_lea.vmem %s0, %s186
        $region36: #{feed_forward_prepared.1} parent=31 // pred_fallthru
          _
      $region32: #{feed_forward_prepared.1} parent=5 // pred_fallthru
        _
      %p188 = scmp.le.s32.totalorder 1, %s14
      %p189 = scmp.lt.s32.totalorder %s14, 3
      %p190 = pnand %p188, %p189
      %p191 = pneg %p190
      // Predicated region
      $region37: #{feed_forward_prepared.1} parent=5 // pred_check
        _
      $region38: #{feed_forward_prepared.1} parent=5 // pred_check_branch
        %193 = sbr.rel (%p190) target = $region40
      $region39: #{feed_forward_prepared.1} parent=5 // pred_region
        %s194 = ssub.s32 %s14, 1
        %p195 = scmp.lt.s32.totalorder %s19, 1
        %s196 = scalar_select %p195, %s19, 1
        %s197 = smul.addr %s196, 8
        %s198 = scalar_lea.vmem %s0, %s197
        %p199 = pneg %p40
        %p200 = pneg %p37
        %p201 = pneg %p61
        %p202 = pneg %p58
        %p203 = pneg %p82
        %p204 = pneg %p79
        %p205 = pneg %p103
        %p206 = pneg %p100
        %p207 = pneg %p124
        %p208 = pneg %p121
        %p209 = pneg %p150
        %p210 = pneg %p147
        %s211 = sand.u32 %s137, 1
        %s212 = scalar_lea.sflag [#allocation3], %s211
        %s213 = sand.u32 %s137, 1
        %s214 = smul.addr %s213, 8
        %s215 = scalar_lea.vmem [#allocation2], %s214
        %p216 = scmp.lt.s32.totalorder %s19, 1
        %s217 = scalar_select %p216, %s19, 1
        %s218 = smul.addr %s217, 8
        %s219 = scalar_lea.vmem %s0, %s218
        %v220 = vld [vmem:[%s219] sm:$0xff]
        %v221 = vld [vmem:[%s1] sm:$0xff]
        %v222 = vld [vmem:[%s1 + $0x8] sm:$0xff]
        %v223 = vld [vmem:[%s1 + $0x10] sm:$0xff]
        %v224 = vld [vmem:[%s1 + $0x18] sm:$0xff]
        %v225 = vld [vmem:[%s2] sm:$0x1]
        %v227 = vperm.slane %v225, 0
        %vm229 = vcmask 261120
        %v231 = vsel %vm229, %v220, 0
        %233 = vmatpush.msra.mxu0 0.0
        %234 = vmatpush.msra.mxu0 0.0
        %235 = vmatpush.msra.mxu0 0.0
        %236 = vmatpush.msra.mxu0 0.0
        %237 = vmatpush.msra.mxu0 0.0
        %238 = vmatpush.msra.mxu0 0.0
        %239 = vmatpush.msra.mxu0 0.0
        %240 = vmatpush.msra.mxu0 0.0
        %241 = vmatpush.msra.mxu0 0.0
        %242 = vmatpush.msra.mxu0 0.0
        %243 = vmatpush.msra.mxu0 0.0
        %244 = vmatpush.msra.mxu0 0.0
        %245 = vmatpush.msra.mxu0 %v224
        %246 = vmatpush.msra.mxu0 %v223
        %247 = vmatpush.msra.mxu0 %v222
        %248 = vmatpush.msra.mxu0 %v221
        %249 = vmatmul.f32.gmra.mxu0 %v231
        %v250 = vpop.f32.mrf.mxu0
        %v251 = vadd.f32 %v227, %v250
        %252 = vdwg.mxu0
        %v253 = vxor.u32 %v251, 2147483648
        %v254 = vmul.f32 %v253, 1.442695
        %v255 = vpow.pop %v254
        %v256 = vadd.f32 %v255, 1.0
        %v257 = vrcp.pop %v256
        %v258 = vmul.f32 %v256, %v257
        %v259 = vsub.f32 1.0, %v258
        %v260 = vmul.f32 %v257, %v259
        %v261 = vadd.f32 %v257, %v260
        %vm262 = vweird.f32 %v256
        %vm263 = vweird.f32 %v257
        %vm264 = vmor %vm262, %vm263
        %v265 = vsel %vm264, %v257, %v261
        %v266 = vand.u32 2147483647, %v256
        %vm267 = vcmp.eq.f32.partialorder %v266, 8.507059e+37
        %v268 = vand.u32 %v256, 2147483648
        %v269 = vor.u32 1.1754944e-38, %v268
        %v270 = vsel %vm267, %v269, %v265
        %v271 = vmul.f32 1.0, %v270
        %v272 = vmul.f32 %v251, %v271
        %v273 = vld [vmem:[%s3] sm:$0xff]
        %v274 = vld [vmem:[%s3 + $0x8] sm:$0xff]
        %v275 = vld [vmem:[%s3 + $0x10] sm:$0xff]
        %v276 = vld [vmem:[%s3 + $0x18] sm:$0xff]
        %v277 = vld [vmem:[%s3 + $0x20] sm:$0xff]
        %v278 = vld [vmem:[%s3 + $0x28] sm:$0xff]
        %v279 = vld [vmem:[%s3 + $0x30] sm:$0xff]
        %v280 = vld [vmem:[%s3 + $0x38] sm:$0xff]
        %v281 = vld [vmem:[%s4] sm:$0x1]
        %v283 = vperm.slane %v281, 0
        %vm285 = vcmask 523264
        %v287 = vsel %vm285, %v272, 0
        %289 = vmatpush.msra.mxu0 0.0
        %290 = vmatpush.msra.mxu0 0.0
        %291 = vmatpush.msra.mxu0 0.0
        %292 = vmatpush.msra.mxu0 0.0
        %293 = vmatpush.msra.mxu0 0.0
        %294 = vmatpush.msra.mxu0 0.0
        %295 = vmatpush.msra.mxu0 0.0
        %296 = vmatpush.msra.mxu0 0.0
        %297 = vmatpush.msra.mxu0 %v280
        %298 = vmatpush.msra.mxu0 %v279
        %299 = vmatpush.msra.mxu0 %v278
        %300 = vmatpush.msra.mxu0 %v277
        %301 = vmatpush.msra.mxu0 %v276
        %302 = vmatpush.msra.mxu0 %v275
        %303 = vmatpush.msra.mxu0 %v274
        %304 = vmatpush.msra.mxu0 %v273
        %305 = vmatmul.f32.gmra.mxu0 %v287
        %v306 = vpop.f32.mrf.mxu0
        %v307 = vadd.f32 %v283, %v306
        %308 = vdwg.mxu0
        %309 = vst.msk [vmem:[%s215] sm:$0xff] %vm229, %v307
        %s310 = sand.u32 %s137, 1
        %s311 = scalar_lea.sflag [#allocation3], %s310
        %s312 = sand.u32 %s137, 1
        %s313 = smul.addr %s312, 8
        %s314 = scalar_lea.vmem [#allocation2], %s313
        // Predicated region
        $region41: #{feed_forward_prepared.1} parent=39 // pred_check
          %p315 = pneg %p147
        $region42: #{feed_forward_prepared.1} parent=39 // pred_check_branch
          %317 = sbr.rel (%p315) target = $region44
        $region43: #{feed_forward_prepared.1} parent=39 // pred_region
          %319 = vsyncadd %s311, 0
          %s320 = smul.addr %s19, 8
          %s321 = scalar_lea.hbm %s5, %s320
          %s323 = sshll.u32 %s314, 4
          %s324 = int_to_ptr.vmem [resolvable:$true] %s323
          %s325 = sshll.u32 %s321, 4
          %s326 = int_to_ptr.hbm [resolvable:$true] %s325
          %328 = dma.vmem_to_hbm [thread:$0]  %s324, 128, %s326, %s311
        $region44: #{feed_forward_prepared.1} parent=39 // pred_fallthru
          _
      $region40: #{feed_forward_prepared.1} parent=5 // pred_fallthru
        _
      %p329 = scmp.le.s32.totalorder 2, %s14
      // Predicated region
      $region45: #{feed_forward_prepared.1} parent=5 // pred_check
        %p330 = pneg %p329
      $region46: #{feed_forward_prepared.1} parent=5 // pred_check_branch
        %332 = sbr.rel (%p330) target = $region48
      $region47: #{feed_forward_prepared.1} parent=5 // pred_region
        %s333 = ssub.s32 %s14, 2
        // Predicated region
        $region49: #{feed_forward_prepared.1} parent=47 // pred_check
          %p334 = pneg %p153
        $region50: #{feed_forward_prepared.1} parent=47 // pred_check_branch
          %336 = sbr.rel (%p334) target = $region52
        $region51: #{feed_forward_prepared.1} parent=47 // pred_region
          %s337 = sand.u32 %s138, 1
          %s338 = scalar_lea.sflag [#allocation3], %s337
          %s339 = sand.u32 %s138, 1
          %s340 = smul.addr %s339, 8
          %s341 = scalar_lea.vmem [#allocation2], %s340
          %343 = dma.done %s338, 128
        $region52: #{feed_forward_prepared.1} parent=47 // pred_fallthru
          _
      $region48: #{feed_forward_prepared.1} parent=5 // pred_fallthru
        _
    $region6: #{feed_forward_prepared.1} parent=1 // loop_footer
      %s18 = sadd.s32 1, %s14
    $region7: #{feed_forward_prepared.1} parent=1 // loop_footer_branch
      %13 = sbr.rel target = $region3
    $region8: #{feed_forward_prepared.1} parent=1 // loop_exit
      _
    %344 = vsyncpa [#allocation3], 1
    %s345 = scalar_lea.sflag [#allocation3], 1
    %346 = vsyncpa %s345, 1

</llo_original>
